<compile_context>
chip_gen: v7x
topology: tpu7x:2x2x1
jax: 0.10.0
libtpu: 0.0.40
codegen_flags: <defaults>
</compile_context>

<pallas_src>
import functools

import jax
import jax.numpy as jnp
from jax.experimental import pallas as pl
from jax.experimental.pallas import tpu as pltpu

LANE = 128            # lane width  (last-dim alignment)
SUBLANE = 8           # sublane width (second-to-last-dim alignment)
DEFAULT_TILE_N = 512  # batch tile: fits comfortably in VMEM on v5e/v6e/v7x


def _round_up(x, m):
    return ((x + m - 1) // m) * m


def _pad2(a, rows, cols):
    r, c = a.shape
    return jnp.pad(a, ((0, rows - r), (0, cols - c)))


# ----------------------------------------------------------------------------
# Fused kernel for one batch tile:
#   obs_ref : (rows, obs_dim)     act_ref : (rows, act_dim)
#   w1o     : (obs_dim, Hp)       w1a     : (act_dim, Hp)     b1 : (1, Hp)
#   w2      : (Hp, Hp)            b2      : (1, Hp)
#   w3      : (1, Hp)   (W3 transposed: last layer done on VPU+XLU)
#   b3      : (1, 1)
#   o_ref   : (rows, 1)
# Hidden dim is zero-padded to Hp (multiple of 128); padding is exact
# (padded cols of h are relu(0)=0 and contribute nothing downstream).
# ----------------------------------------------------------------------------
def qfunction_kernel(obs_ref, act_ref, w1o_ref, w1a_ref, b1_ref,
                     w2_ref, b2_ref, w3_ref, b3_ref, o_ref):
    # Layer 1: concat folded into two MXU matmuls.
    h = (jnp.dot(obs_ref[...], w1o_ref[...], preferred_element_type=jnp.float32)
         + jnp.dot(act_ref[...], w1a_ref[...], preferred_element_type=jnp.float32)
         + b1_ref[...])
    h = jnp.maximum(h, 0.0)
    # Layer 2: MXU matmul, f32 accumulate.
    h = jnp.dot(h, w2_ref[...], preferred_element_type=jnp.float32) + b2_ref[...]
    h = jnp.maximum(h, 0.0)
    # Layer 3: one real output column -> VPU elementwise mul + lane-axis reduce
    # (XLU) instead of a full MXU pass with 127 dead columns.
    o = jnp.sum(h * w3_ref[...], axis=-1, keepdims=True) + b3_ref[...]
    o_ref[...] = o


# ----------------------------------------------------------------------------
# One-time parameter prep (hoisted out of the forward):
#   - split W1 into obs-rows and action-rows (kills the wrapper concat)
#   - lane-pad the hidden dim to a multiple of 128 (exact: zero padding)
#   - transpose W3 to a (1, Hp) row for the VPU/XLU last layer
# Params are stored (in_features, out_features) so forward is x @ W + b.
# ----------------------------------------------------------------------------
def prep_params(params, obs_dim):
    W1, b1, W2, b2, W3, b3 = params
    D, H = W1.shape
    Hp = _round_up(H, LANE)
    W1o = _pad2(W1[:obs_dim, :], obs_dim, Hp)
    W1a = _pad2(W1[obs_dim:, :], D - obs_dim, Hp)
    return (
        W1o.astype(jnp.float32),
        W1a.astype(jnp.float32),
        _pad2(b1.reshape(1, -1), 1, Hp).astype(jnp.float32),
        _pad2(W2, Hp, Hp).astype(jnp.float32),
        _pad2(b2.reshape(1, -1), 1, Hp).astype(jnp.float32),
        _pad2(W3.T, 1, Hp).astype(jnp.float32),   # (1, Hp)
        b3.reshape(1, 1).astype(jnp.float32),     # (1, 1)
    )


# ----------------------------------------------------------------------------
# jit'ed forward: single fused pallas_call.
#   N <= tile_n : one full-array block, grid=(1,), zero wrapper glue.
#   N >  tile_n : batch tiled over a parallel grid axis (megacore on v7x),
#                 weights VMEM-resident via constant index maps, inputs/outputs
#                 double-buffered by BlockSpec pipelining.
# ----------------------------------------------------------------------------
@functools.partial(jax.jit, static_argnames=("tile_n",))
def qfunction_forward(obs, action, padded_params, tile_n=DEFAULT_TILE_N):
    assert obs.shape[0] == action.shape[0]
    N = obs.shape[0]
    obs_dim = obs.shape[1]
    act_dim = action.shape[1]
    W1o, W1a, b1p, W2p, b2p, w3row, b3s = padded_params
    Hp = W2p.shape[0]

    obs = obs.astype(jnp.float32)
    action = action.astype(jnp.float32)

    if N <= tile_n:
        # Full-array blocks (block_shape == array dims satisfies the (8,128)
        # rule); no row padding, no slicing.
        rows, grid_n, Np = N, 1, N
    else:
        rows = tile_n
        Np = _round_up(N, tile_n)
        grid_n = Np // tile_n
        obs = jnp.pad(obs, ((0, Np - N), (0, 0)))
        action = jnp.pad(action, ((0, Np - N), (0, 0)))

    out = pl.pallas_call(
        qfunction_kernel,
        out_shape=jax.ShapeDtypeStruct((Np, 1), jnp.float32),
        grid=(grid_n,),
        in_specs=[
            pl.BlockSpec((rows, obs_dim), lambda i: (i, 0)),   # obs tile
            pl.BlockSpec((rows, act_dim), lambda i: (i, 0)),   # action tile
            pl.BlockSpec((obs_dim, Hp), lambda i: (0, 0)),     # W1_obs (resident)
            pl.BlockSpec((act_dim, Hp), lambda i: (0, 0)),     # W1_act (resident)
            pl.BlockSpec((1, Hp), lambda i: (0, 0)),           # b1
            pl.BlockSpec((Hp, Hp), lambda i: (0, 0)),          # W2
            pl.BlockSpec((1, Hp), lambda i: (0, 0)),           # b2
            pl.BlockSpec((1, Hp), lambda i: (0, 0)),           # w3 row
            pl.BlockSpec((1, 1), lambda i: (0, 0)),            # b3
        ],
        out_specs=pl.BlockSpec((rows, 1), lambda i: (i, 0)),
        compiler_params=pltpu.CompilerParams(
            dimension_semantics=("parallel",)),  # v7x: shard batch across 2 TCs
    )(obs, action, W1o, W1a, b1p, W2p, b2p, w3row, b3s)

    return out if Np == N else out[:N]


# ----------------------------------------------------------------------------
# Pure-JAX reference (exact PyTorch semantics, highest-precision matmuls).
# ----------------------------------------------------------------------------
def ref_forward(obs, action, params):
    W1, b1, W2, b2, W3, b3 = params
    hi = jax.lax.Precision.HIGHEST
    x = jnp.concatenate([obs, action], axis=1)
    h = jnp.maximum(jnp.dot(x, W1, precision=hi) + b1, 0.0)
    h = jnp.maximum(jnp.dot(h, W2, precision=hi) + b2, 0.0)
    return jnp.dot(h, W3, precision=hi) + b3


# ----------------------------------------------------------------------------
# Deterministic synthetic parameter init (shapes from QFunction.__init__).
# ----------------------------------------------------------------------------
def init_params(key, obs_dim, action_dim, hidden_dim):
    D = obs_dim + action_dim
    key, k1, k2, k3, k4, k5, k6 = jax.random.split(key, 7)
    W1 = 0.1 * jax.random.normal(k1, (D, hidden_dim), jnp.float32)
    b1 = 0.05 * jax.random.normal(k2, (hidden_dim,), jnp.float32)
    W2 = 0.1 * jax.random.normal(k3, (hidden_dim, hidden_dim), jnp.float32)
    b2 = 0.05 * jax.random.normal(k4, (hidden_dim,), jnp.float32)
    W3 = 0.1 * jax.random.normal(k5, (hidden_dim, 1), jnp.float32)
    b3 = 0.05 * jax.random.normal(k6, (1,), jnp.float32)
    return (W1, b1, W2, b2, W3, b3)


if __name__ == "__main__":
    key = jax.random.PRNGKey(0)
    key, ko, ka, ko2, ka2 = jax.random.split(key, 5)

    obs_dim, action_dim, hidden_dim = 17, 6, 32
    params = init_params(key, obs_dim, action_dim, hidden_dim)
    padded_params = prep_params(params, obs_dim)       # hoisted, one-time

    # --- small batch: latency path (single full-array block, grid=(1,)) ---
    batch = 2
    obs = jax.random.normal(ko, (batch, obs_dim), jnp.float32)
    action = jax.random.normal(ka, (batch, action_dim), jnp.float32)
    q = jax.block_until_ready(qfunction_forward(obs, action, padded_params))
    assert q.shape == (batch, 1), q.shape
    q_ref = jax.block_until_ready(ref_forward(obs, action, params))
    assert jnp.allclose(q, q_ref, atol=1e-4, rtol=1e-4), \
        float(jnp.max(jnp.abs(q - q_ref)))

    # --- larger batch: tiled/pipelined path (grid over N, parallel axis) ---
    batch2 = 1037   # non-multiple of tile -> exercises row padding + slice
    obs2 = jax.random.normal(ko2, (batch2, obs_dim), jnp.float32)
    action2 = jax.random.normal(ka2, (batch2, action_dim), jnp.float32)
    q2 = jax.block_until_ready(qfunction_forward(obs2, action2, padded_params))
    assert q2.shape == (batch2, 1), q2.shape
    q2_ref = jax.block_until_ready(ref_forward(obs2, action2, params))
    assert jnp.allclose(q2, q2_ref, atol=1e-4, rtol=1e-4), \
        float(jnp.max(jnp.abs(q2 - q2_ref)))

    print("KERNEL_OK")
</pallas_src>

<mosaic_0001>
module attributes {stable_mosaic.version = 11 : i64} {
  func.func @qfunction_kernel(%arg0: i32, %arg1: memref<2x17xf32, #tpu.memory_space<vmem>>, %arg2: memref<2x6xf32, #tpu.memory_space<vmem>>, %arg3: memref<17x128xf32, #tpu.memory_space<vmem>>, %arg4: memref<6x128xf32, #tpu.memory_space<vmem>>, %arg5: memref<1x128xf32, #tpu.memory_space<vmem>>, %arg6: memref<128x128xf32, #tpu.memory_space<vmem>>, %arg7: memref<1x128xf32, #tpu.memory_space<vmem>>, %arg8: memref<1x128xf32, #tpu.memory_space<vmem>>, %arg9: memref<1x1xf32, #tpu.memory_space<vmem>>, %arg10: memref<2x1xf32, #tpu.memory_space<vmem>>) attributes {dimension_semantics = [#tpu.dimension_semantics<parallel>], iteration_bounds = array<i64: 1>, scalar_prefetch = 0 : i64, scratch_operands = 0 : i64, tpu.core_type = #tpu.core_type<tc>, window_params = [{transform_indices = @transform_0, window_bounds = array<i64: 2, 17>}, {transform_indices = @transform_1, window_bounds = array<i64: 2, 6>}, {pipeline_mode = #tpu.pipeline_mode<synchronous>, transform_indices = @transform_2, window_bounds = array<i64: 17, 128>}, {pipeline_mode = #tpu.pipeline_mode<synchronous>, transform_indices = @transform_3, window_bounds = array<i64: 6, 128>}, {pipeline_mode = #tpu.pipeline_mode<synchronous>, transform_indices = @transform_4, window_bounds = array<i64: 1, 128>}, {pipeline_mode = #tpu.pipeline_mode<synchronous>, transform_indices = @transform_5, window_bounds = array<i64: 128, 128>}, {pipeline_mode = #tpu.pipeline_mode<synchronous>, transform_indices = @transform_6, window_bounds = array<i64: 1, 128>}, {pipeline_mode = #tpu.pipeline_mode<synchronous>, transform_indices = @transform_7, window_bounds = array<i64: 1, 128>}, {pipeline_mode = #tpu.pipeline_mode<synchronous>, transform_indices = @transform_8, window_bounds = array<i64: 1, 1>}, {transform_indices = @transform_9, window_bounds = array<i64: 2, 1>}]} {
    %c0 = arith.constant 0 : index
    %c0_0 = arith.constant 0 : index
    %0 = vector.load %arg1[%c0, %c0_0] : memref<2x17xf32, #tpu.memory_space<vmem>>, vector<2x17xf32>
    %c0_1 = arith.constant 0 : index
    %c0_2 = arith.constant 0 : index
    %1 = vector.load %arg3[%c0_1, %c0_2] : memref<17x128xf32, #tpu.memory_space<vmem>>, vector<17x128xf32>
    %cst = arith.constant dense<0.000000e+00> : vector<2x128xf32>
    %2 = tpu.matmul %0, %1, %cst {dimension_numbers = #tpu.dot_dimension_numbers<[1], [0], [0], [1], [0, 0, 1, 1], [], []>} : vector<2x17xf32>, vector<17x128xf32>, vector<2x128xf32> -> vector<2x128xf32>
    %c0_3 = arith.constant 0 : index
    %c0_4 = arith.constant 0 : index
    %3 = vector.load %arg2[%c0_3, %c0_4] : memref<2x6xf32, #tpu.memory_space<vmem>>, vector<2x6xf32>
    %c0_5 = arith.constant 0 : index
    %c0_6 = arith.constant 0 : index
    %4 = vector.load %arg4[%c0_5, %c0_6] : memref<6x128xf32, #tpu.memory_space<vmem>>, vector<6x128xf32>
    %cst_7 = arith.constant dense<0.000000e+00> : vector<2x128xf32>
    %5 = tpu.matmul %3, %4, %cst_7 {dimension_numbers = #tpu.dot_dimension_numbers<[1], [0], [0], [1], [0, 0, 1, 1], [], []>} : vector<2x6xf32>, vector<6x128xf32>, vector<2x128xf32> -> vector<2x128xf32>
    %6 = arith.addf %2, %5 : vector<2x128xf32>
    %c0_8 = arith.constant 0 : index
    %c0_9 = arith.constant 0 : index
    %7 = vector.load %arg5[%c0_8, %c0_9] : memref<1x128xf32, #tpu.memory_space<vmem>>, vector<1x128xf32>
    %8 = vector.broadcast %7 : vector<1x128xf32> to vector<2x128xf32>
    %9 = arith.addf %6, %8 : vector<2x128xf32>
    %cst_10 = arith.constant 0.000000e+00 : f32
    %10 = vector.broadcast %cst_10 : f32 to vector<2x128xf32>
    %11 = arith.maximumf %9, %10 : vector<2x128xf32>
    %c0_11 = arith.constant 0 : index
    %c0_12 = arith.constant 0 : index
    %12 = vector.load %arg6[%c0_11, %c0_12] : memref<128x128xf32, #tpu.memory_space<vmem>>, vector<128x128xf32>
    %cst_13 = arith.constant dense<0.000000e+00> : vector<2x128xf32>
    %13 = tpu.matmul %11, %12, %cst_13 {dimension_numbers = #tpu.dot_dimension_numbers<[1], [0], [0], [1], [0, 0, 1, 1], [], []>} : vector<2x128xf32>, vector<128x128xf32>, vector<2x128xf32> -> vector<2x128xf32>
    %c0_14 = arith.constant 0 : index
    %c0_15 = arith.constant 0 : index
    %14 = vector.load %arg7[%c0_14, %c0_15] : memref<1x128xf32, #tpu.memory_space<vmem>>, vector<1x128xf32>
    %15 = vector.broadcast %14 : vector<1x128xf32> to vector<2x128xf32>
    %16 = arith.addf %13, %15 : vector<2x128xf32>
    %cst_16 = arith.constant 0.000000e+00 : f32
    %17 = vector.broadcast %cst_16 : f32 to vector<2x128xf32>
    %18 = arith.maximumf %16, %17 : vector<2x128xf32>
    %c0_17 = arith.constant 0 : index
    %c0_18 = arith.constant 0 : index
    %19 = vector.load %arg8[%c0_17, %c0_18] : memref<1x128xf32, #tpu.memory_space<vmem>>, vector<1x128xf32>
    %20 = vector.broadcast %19 : vector<1x128xf32> to vector<2x128xf32>
    %21 = arith.mulf %18, %20 : vector<2x128xf32>
    %cst_19 = arith.constant dense<0.000000e+00> : vector<2xf32>
    %22 = vector.multi_reduction <add>, %21, %cst_19 [1] : vector<2x128xf32> to vector<2xf32>
    %23 = vector.shape_cast %22 : vector<2xf32> to vector<2x1xf32>
    %c0_20 = arith.constant 0 : index
    %c0_21 = arith.constant 0 : index
    %24 = vector.load %arg9[%c0_20, %c0_21] : memref<1x1xf32, #tpu.memory_space<vmem>>, vector<1x1xf32>
    %25 = vector.broadcast %24 : vector<1x1xf32> to vector<2x1xf32>
    %26 = arith.addf %23, %25 : vector<2x1xf32>
    %c0_22 = arith.constant 0 : index
    %c0_23 = arith.constant 0 : index
    %27 = vector.load %arg10[%c0_22, %c0_23] : memref<2x1xf32, #tpu.memory_space<vmem>>, vector<2x1xf32>
    tpu.vector_store %arg10[%c0_22, %c0_23], %26 {strides = array<i32>} : memref<2x1xf32, #tpu.memory_space<vmem>>, vector<2x1xf32>,
    return
  }
  func.func @transform_0(%arg0: i32) -> (i32, i32) {
    %c0_i32 = arith.constant 0 : i32
    %c0_i32_0 = arith.constant 0 : i32
    return %arg0, %c0_i32 : i32, i32
  }
  func.func @transform_1(%arg0: i32) -> (i32, i32) {
    %c0_i32 = arith.constant 0 : i32
    %c0_i32_0 = arith.constant 0 : i32
    return %arg0, %c0_i32 : i32, i32
  }
  func.func @transform_2(%arg0: i32) -> (i32, i32) {
    %c0_i32 = arith.constant 0 : i32
    %c0_i32_0 = arith.constant 0 : i32
    %c0_i32_1 = arith.constant 0 : i32
    return %c0_i32, %c0_i32_0 : i32, i32
  }
  func.func @transform_3(%arg0: i32) -> (i32, i32) {
    %c0_i32 = arith.constant 0 : i32
    %c0_i32_0 = arith.constant 0 : i32
    %c0_i32_1 = arith.constant 0 : i32
    return %c0_i32, %c0_i32_0 : i32, i32
  }
  func.func @transform_4(%arg0: i32) -> (i32, i32) {
    %c0_i32 = arith.constant 0 : i32
    %c0_i32_0 = arith.constant 0 : i32
    %c0_i32_1 = arith.constant 0 : i32
    return %c0_i32, %c0_i32_0 : i32, i32
  }
  func.func @transform_5(%arg0: i32) -> (i32, i32) {
    %c0_i32 = arith.constant 0 : i32
    %c0_i32_0 = arith.constant 0 : i32
    %c0_i32_1 = arith.constant 0 : i32
    return %c0_i32, %c0_i32_0 : i32, i32
  }
  func.func @transform_6(%arg0: i32) -> (i32, i32) {
    %c0_i32 = arith.constant 0 : i32
    %c0_i32_0 = arith.constant 0 : i32
    %c0_i32_1 = arith.constant 0 : i32
    return %c0_i32, %c0_i32_0 : i32, i32
  }
  func.func @transform_7(%arg0: i32) -> (i32, i32) {
    %c0_i32 = arith.constant 0 : i32
    %c0_i32_0 = arith.constant 0 : i32
    %c0_i32_1 = arith.constant 0 : i32
    return %c0_i32, %c0_i32_0 : i32, i32
  }
  func.func @transform_8(%arg0: i32) -> (i32, i32) {
    %c0_i32 = arith.constant 0 : i32
    %c0_i32_0 = arith.constant 0 : i32
    %c0_i32_1 = arith.constant 0 : i32
    return %c0_i32, %c0_i32_0 : i32, i32
  }
  func.func @transform_9(%arg0: i32) -> (i32, i32) {
    %c0_i32 = arith.constant 0 : i32
    %c0_i32_0 = arith.constant 0 : i32
    return %arg0, %c0_i32 : i32, i32
  }
}

</mosaic_0001>

<llo_original>
// kernel: qfunction_forward.1
$region0: #{qfunction_forward.1}
  #allocation0 [shape = 'u32[]', space=smem, size = 0x4, offset = 0x4, fixed_abs, tag = 'smem constant byte address 0x4 - core index']
  #allocation1 [shape = 'u32[144,128]{1,0:T(1,128)}', space=vmem, size = 0x12000, scoped, tag = 'internal scratch']
  #allocation2 [shape = 'f32[1,1]{1,0:T(1,128)S(1)}', space=vmem, size = 0x200, scoped, tag = 'scoped memory for qfunction_forward.1']
  %s0 = inlined_call_operand.vmem [shape: f32[2,17], index: 0, kind: input, shape index: {}]
  %s1 = inlined_call_operand.vmem [shape: f32[2,6], index: 1, kind: input, shape index: {}]
  %s2 = inlined_call_operand.hbm [shape: f32[17,128], index: 2, kind: input, shape index: {}]
  %s3 = inlined_call_operand.vmem [shape: f32[6,128], index: 3, kind: input, shape index: {}]
  %s4 = inlined_call_operand.vmem [shape: f32[1,128], index: 4, kind: input, shape index: {}]
  %s5 = inlined_call_operand.hbm [shape: f32[128,128], index: 5, kind: input, shape index: {}]
  %s6 = inlined_call_operand.vmem [shape: f32[1,128], index: 6, kind: input, shape index: {}]
  %s7 = inlined_call_operand.vmem [shape: f32[1,128], index: 7, kind: input, shape index: {}]
  %s8 = inlined_call_operand.<no memory space> [shape: f32[1,1], index: 8, kind: input, shape index: {}]
  %s9 = inlined_call_operand.vmem [shape: f32[2,1], index: 9, kind: output, shape index: {}]
  %s10 = sld [smem:[#allocation0]]
  $region54: #{qfunction_forward.1} parent=0
    _
  %s12 = ssub.s32 1, %s10
  %s13 = scalar_select 0, %s12, %s10
  %v14 = vstv %s8
  %15 = vst [vmem:[#allocation2] sm:$0x1] %v14
  $region1: #{qfunction_forward.1} parent=0
    #allocation3 [shape = 'u8[12288]{0}', space=vmem, size = 0x3000, scoped, tag = 'input window, operand 2, single buffered']
    #allocation4 [shape = 's32[1]{0}', space=sflag, size = 0x4, scoped, tag = 'scoped memory for qfunction_forward.1']
    #allocation5 [shape = 'u8[65536]{0}', space=vmem, size = 0x10000, scoped, tag = 'input window, operand 5, single buffered']
    #allocation6 [shape = 's32[1]{0}', space=sflag, size = 0x4, scoped, tag = 'scoped memory for qfunction_forward.1']
    %16 = vsyncpa [#allocation4], 0
    %17 = vsyncpa [#allocation6], 0
    // Predicated region
    $region2: #{qfunction_forward.1} parent=1 // pred_check
      _
    $region3: #{qfunction_forward.1} parent=1 // pred_check_branch
      %19 = sbr.rel (0) target = $region5
    $region4: #{qfunction_forward.1} parent=1 // pred_region
      _
    $region5: #{qfunction_forward.1} parent=1 // pred_fallthru
      _
    // Predicated region
    $region6: #{qfunction_forward.1} parent=1 // pred_check
      _
    $region7: #{qfunction_forward.1} parent=1 // pred_check_branch
      %21 = sbr.rel (0) target = $region9
    $region8: #{qfunction_forward.1} parent=1 // pred_region
      _
    $region9: #{qfunction_forward.1} parent=1 // pred_fallthru
      _
    // Predicated region
    $region10: #{qfunction_forward.1} parent=1 // pred_check
      _
    $region11: #{qfunction_forward.1} parent=1 // pred_check_branch
      %23 = sbr.rel (0) target = $region13
    $region12: #{qfunction_forward.1} parent=1 // pred_region
      %s25 = ssub.s32 384, 384
      %26 = vsyncadd [#allocation4], %s25
      %s27 = sshll.u32 [#allocation3], 4
      %s28 = int_to_ptr.vmem [resolvable:$true] %s27
      %33 = dma.hbm_to_vmem [thread:$0]  %s2, 384, %s28, [#allocation4], 128, 128, 8
    $region13: #{qfunction_forward.1} parent=1 // pred_fallthru
      _
    // Predicated region
    $region14: #{qfunction_forward.1} parent=1 // pred_check
      _
    $region15: #{qfunction_forward.1} parent=1 // pred_check_branch
      %35 = sbr.rel (0) target = $region17
    $region16: #{qfunction_forward.1} parent=1 // pred_region
      _
    $region17: #{qfunction_forward.1} parent=1 // pred_fallthru
      _
    // Predicated region
    $region18: #{qfunction_forward.1} parent=1 // pred_check
      _
    $region19: #{qfunction_forward.1} parent=1 // pred_check_branch
      %37 = sbr.rel (0) target = $region21
    $region20: #{qfunction_forward.1} parent=1 // pred_region
      _
    $region21: #{qfunction_forward.1} parent=1 // pred_fallthru
      _
    // Predicated region
    $region22: #{qfunction_forward.1} parent=1 // pred_check
      _
    $region23: #{qfunction_forward.1} parent=1 // pred_check_branch
      %39 = sbr.rel (0) target = $region25
    $region24: #{qfunction_forward.1} parent=1 // pred_region
      %s41 = ssub.s32 2048, 2048
      %42 = vsyncadd [#allocation6], %s41
      %s43 = sshll.u32 [#allocation5], 4
      %s44 = int_to_ptr.vmem [resolvable:$true] %s43
      %49 = dma.hbm_to_vmem [thread:$0]  %s5, 2048, %s44, [#allocation6], 128, 128, 8
    $region25: #{qfunction_forward.1} parent=1 // pred_fallthru
      _
    // Predicated region
    $region26: #{qfunction_forward.1} parent=1 // pred_check
      _
    $region27: #{qfunction_forward.1} parent=1 // pred_check_branch
      %51 = sbr.rel (0) target = $region29
    $region28: #{qfunction_forward.1} parent=1 // pred_region
      _
    $region29: #{qfunction_forward.1} parent=1 // pred_fallthru
      _
    // Predicated region
    $region30: #{qfunction_forward.1} parent=1 // pred_check
      _
    $region31: #{qfunction_forward.1} parent=1 // pred_check_branch
      %53 = sbr.rel (0) target = $region33
    $region32: #{qfunction_forward.1} parent=1 // pred_region
      _
    $region33: #{qfunction_forward.1} parent=1 // pred_fallthru
      _
    // Predicated region
    $region34: #{qfunction_forward.1} parent=1 // pred_check
      _
    $region35: #{qfunction_forward.1} parent=1 // pred_check_branch
      %55 = sbr.rel (0) target = $region37
    $region36: #{qfunction_forward.1} parent=1 // pred_region
      _
    $region37: #{qfunction_forward.1} parent=1 // pred_fallthru
      _
    // Predicated region
    $region38: #{qfunction_forward.1} parent=1 // pred_check
      _
    $region39: #{qfunction_forward.1} parent=1 // pred_check_branch
      %57 = sbr.rel (0) target = $region41
    $region40: #{qfunction_forward.1} parent=1 // pred_region
      %58 = dma.done [#allocation4], 384
    $region41: #{qfunction_forward.1} parent=1 // pred_fallthru
      _
    // Predicated region
    $region42: #{qfunction_forward.1} parent=1 // pred_check
      _
    $region43: #{qfunction_forward.1} parent=1 // pred_check_branch
      %60 = sbr.rel (0) target = $region45
    $region44: #{qfunction_forward.1} parent=1 // pred_region
      %61 = dma.done [#allocation6], 2048
    $region45: #{qfunction_forward.1} parent=1 // pred_fallthru
      _
    %v62 = vld [vmem:[%s0] sm:$0x3]
    %v63 = vld [vmem:[#allocation3] sm:$0xff]
    %v64 = vld [vmem:[#allocation3 + $0x8] sm:$0xff]
    %v65 = vld [vmem:[#allocation3 + $0x10] sm:$0x1]
    %v66 = vld [vmem:[%s1] sm:$0x3]
    %v67 = vld [vmem:[%s3] sm:$0x3f]
    %vm68 = vcmask 48128
    %v70 = vsel %vm68, %v66, 0
    %vm72 = vcmask 1045504
    %v74 = vsel %vm72, %v67, 0
    %76 = vmatprep.subr.mxu0 0.0
    %77 = vmatpush1.msra.mxu0 %v74
    %78 = vmatprep.subr.mxu0 0.0
    %79 = vmatpush1.msra.mxu0 0.0
    %80 = vmatprep.subr.mxu0 0.0
    %81 = vmatpush1.msra.mxu0 0.0
    %82 = vmatprep.subr.mxu0 0.0
    %83 = vmatpush1.msra.mxu0 0.0
    %84 = vmatprep.subr.mxu0 0.0
    %85 = vmatpush1.msra.mxu0 0.0
    %86 = vmatprep.subr.mxu0 0.0
    %87 = vmatpush1.msra.mxu0 0.0
    %88 = vmatprep.subr.mxu0 0.0
    %89 = vmatpush1.msra.mxu0 0.0
    %90 = vmatprep.subr.mxu0 0.0
    %91 = vmatpush1.msra.mxu0 0.0
    %92 = vmatprep.subr.mxu0 0.0
    %93 = vmatpush1.msra.mxu0 0.0
    %94 = vmatprep.subr.mxu0 0.0
    %95 = vmatpush1.msra.mxu0 0.0
    %96 = vmatprep.subr.mxu0 0.0
    %97 = vmatpush1.msra.mxu0 0.0
    %98 = vmatprep.subr.mxu0 0.0
    %99 = vmatpush1.msra.mxu0 0.0
    %100 = vmatprep.subr.mxu0 0.0
    %101 = vmatpush1.msra.mxu0 0.0
    %102 = vmatprep.subr.mxu0 0.0
    %103 = vmatpush1.msra.mxu0 0.0
    %104 = vmatprep.subr.mxu0 0.0
    %105 = vmatpush1.msra.mxu0 0.0
    %106 = vmatprep.subr.mxu0 0.0
    %107 = vmatpush1.msra.mxu0 0.0
    %108 = vmatprep.subr.mxu0 0.0
    %109 = vmatpush1.msra.mxu0 0.0
    %110 = vmatprep.subr.mxu0 0.0
    %111 = vmatpush1.msra.mxu0 0.0
    %112 = vmatprep.subr.mxu0 0.0
    %113 = vmatpush1.msra.mxu0 0.0
    %114 = vmatprep.subr.mxu0 0.0
    %115 = vmatpush1.msra.mxu0 0.0
    %116 = vmatprep.subr.mxu0 0.0
    %117 = vmatpush1.msra.mxu0 0.0
    %118 = vmatprep.subr.mxu0 0.0
    %119 = vmatpush1.msra.mxu0 0.0
    %120 = vmatprep.subr.mxu0 0.0
    %121 = vmatpush1.msra.mxu0 0.0
    %122 = vmatprep.subr.mxu0 0.0
    %123 = vmatpush1.msra.mxu0 0.0
    %124 = vmatprep.subr.mxu0 0.0
    %125 = vmatpush1.msra.mxu0 0.0
    %126 = vmatprep.subr.mxu0 0.0
    %127 = vmatpush1.msra.mxu0 0.0
    %128 = vmatprep.subr.mxu0 0.0
    %129 = vmatpush1.msra.mxu0 0.0
    %130 = vmatprep.subr.mxu0 0.0
    %131 = vmatpush1.msra.mxu0 0.0
    %132 = vmatprep.subr.mxu0 0.0
    %133 = vmatpush1.msra.mxu0 0.0
    %134 = vmatprep.subr.mxu0 0.0
    %135 = vmatpush1.msra.mxu0 0.0
    %136 = vmatprep.subr.mxu0 0.0
    %137 = vmatpush1.msra.mxu0 0.0
    %138 = vmatprep.subr.mxu0 0.0
    %139 = vmatpush1.msra.mxu0 0.0
    %140 = vmatprep.mubr.f32.mxu0 0.0
    %141 = vmatmul.mubr.f32.gmra.mrb[0].mxu0 %v70
    %v142 = vpop.f32.mrb[0].mxu0
    %v143 = vadd.f32 0.0, %v142
    %v144 = vpop.f32.mrb[0].mxu0
    %145 = vdwg.mxu0
    %vm146 = vcmask 138240
    %v148 = vsel %vm146, %v62, 0
    %vm150 = vcmask 1040384
    %v152 = vsel %vm150, %v65, 0
    %154 = vmatprep.subr.mxu0 0.0
    %155 = vmatpush1.msra.mxu0 %v63
    %156 = vmatprep.subr.mxu0 0.0
    %157 = vmatpush1.msra.mxu0 %v64
    %158 = vmatprep.subr.mxu0 0.0
    %159 = vmatpush1.msra.mxu0 %v152
    %160 = vmatprep.subr.mxu0 0.0
    %161 = vmatpush1.msra.mxu0 0.0
    %162 = vmatprep.subr.mxu0 0.0
    %163 = vmatpush1.msra.mxu0 0.0
    %164 = vmatprep.subr.mxu0 0.0
    %165 = vmatpush1.msra.mxu0 0.0
    %166 = vmatprep.subr.mxu0 0.0
    %167 = vmatpush1.msra.mxu0 0.0
    %168 = vmatprep.subr.mxu0 0.0
    %169 = vmatpush1.msra.mxu0 0.0
    %170 = vmatprep.subr.mxu0 0.0
    %171 = vmatpush1.msra.mxu0 0.0
    %172 = vmatprep.subr.mxu0 0.0
    %173 = vmatpush1.msra.mxu0 0.0
    %174 = vmatprep.subr.mxu0 0.0
    %175 = vmatpush1.msra.mxu0 0.0
    %176 = vmatprep.subr.mxu0 0.0
    %177 = vmatpush1.msra.mxu0 0.0
    %178 = vmatprep.subr.mxu0 0.0
    %179 = vmatpush1.msra.mxu0 0.0
    %180 = vmatprep.subr.mxu0 0.0
    %181 = vmatpush1.msra.mxu0 0.0
    %182 = vmatprep.subr.mxu0 0.0
    %183 = vmatpush1.msra.mxu0 0.0
    %184 = vmatprep.subr.mxu0 0.0
    %185 = vmatpush1.msra.mxu0 0.0
    %186 = vmatprep.subr.mxu0 0.0
    %187 = vmatpush1.msra.mxu0 0.0
    %188 = vmatprep.subr.mxu0 0.0
    %189 = vmatpush1.msra.mxu0 0.0
    %190 = vmatprep.subr.mxu0 0.0
    %191 = vmatpush1.msra.mxu0 0.0
    %192 = vmatprep.subr.mxu0 0.0
    %193 = vmatpush1.msra.mxu0 0.0
    %194 = vmatprep.subr.mxu0 0.0
    %195 = vmatpush1.msra.mxu0 0.0
    %196 = vmatprep.subr.mxu0 0.0
    %197 = vmatpush1.msra.mxu0 0.0
    %198 = vmatprep.subr.mxu0 0.0
    %199 = vmatpush1.msra.mxu0 0.0
    %200 = vmatprep.subr.mxu0 0.0
    %201 = vmatpush1.msra.mxu0 0.0
    %202 = vmatprep.subr.mxu0 0.0
    %203 = vmatpush1.msra.mxu0 0.0
    %204 = vmatprep.subr.mxu0 0.0
    %205 = vmatpush1.msra.mxu0 0.0
    %206 = vmatprep.subr.mxu0 0.0
    %207 = vmatpush1.msra.mxu0 0.0
    %208 = vmatprep.subr.mxu0 0.0
    %209 = vmatpush1.msra.mxu0 0.0
    %210 = vmatprep.subr.mxu0 0.0
    %211 = vmatpush1.msra.mxu0 0.0
    %212 = vmatprep.subr.mxu0 0.0
    %213 = vmatpush1.msra.mxu0 0.0
    %214 = vmatprep.subr.mxu0 0.0
    %215 = vmatpush1.msra.mxu0 0.0
    %216 = vmatprep.subr.mxu0 0.0
    %217 = vmatpush1.msra.mxu0 0.0
    %218 = vmatprep.mubr.f32.mxu0 0.0
    %219 = vmatmul.mubr.f32.gmra.mrb[0].mxu0 %v148
    %v220 = vpop.f32.mrb[0].mxu0
    %v221 = vadd.f32 %v143, %v220
    %v222 = vpop.f32.mrb[0].mxu0
    %223 = vdwg.mxu0
    %v224 = vld [vmem:[%s4] sm:$0x1]
    %v226 = vlaneseq
    %v227 = vshrl.u32 %v226, 7
    %v228 = vsub.s32 0, %v227
    %v229 = vrot.slane %v224, %v228
    %v231 = vadd.f32 %v221, %v229
    %v232 = vmax.f32 %v231, 0.0
    %v233 = vld [vmem:[#allocation5] sm:$0xff]
    %v234 = vld [vmem:[#allocation5 + $0x8] sm:$0xff]
    %v235 = vld [vmem:[#allocation5 + $0x10] sm:$0xff]
    %v236 = vld [vmem:[#allocation5 + $0x18] sm:$0xff]
    %v237 = vld [vmem:[#allocation5 + $0x20] sm:$0xff]
    %v238 = vld [vmem:[#allocation5 + $0x28] sm:$0xff]
    %v239 = vld [vmem:[#allocation5 + $0x30] sm:$0xff]
    %v240 = vld [vmem:[#allocation5 + $0x38] sm:$0xff]
    %v241 = vld [vmem:[#allocation5 + $0x40] sm:$0xff]
    %v242 = vld [vmem:[#allocation5 + $0x48] sm:$0xff]
    %v243 = vld [vmem:[#allocation5 + $0x50] sm:$0xff]
    %v244 = vld [vmem:[#allocation5 + $0x58] sm:$0xff]
    %v245 = vld [vmem:[#allocation5 + $0x60] sm:$0xff]
    %v246 = vld [vmem:[#allocation5 + $0x68] sm:$0xff]
    %v247 = vld [vmem:[#allocation5 + $0x70] sm:$0xff]
    %v248 = vld [vmem:[#allocation5 + $0x78] sm:$0xff]
    %v249 = vld [vmem:[%s6] sm:$0x1]
    %v251 = vlaneseq
    %v252 = vshrl.u32 %v251, 7
    %v253 = vsub.s32 0, %v252
    %v254 = vrot.slane %v249, %v253
    %256 = vmatprep.subr.mxu0 0.0
    %257 = vmatpush1.msra.mxu0 %v233
    %258 = vmatprep.subr.mxu0 0.0
    %259 = vmatpush1.msra.mxu0 %v234
    %260 = vmatprep.subr.mxu0 0.0
    %261 = vmatpush1.msra.mxu0 %v235
    %262 = vmatprep.subr.mxu0 0.0
    %263 = vmatpush1.msra.mxu0 %v236
    %264 = vmatprep.subr.mxu0 0.0
    %265 = vmatpush1.msra.mxu0 %v237
    %266 = vmatprep.subr.mxu0 0.0
    %267 = vmatpush1.msra.mxu0 %v238
    %268 = vmatprep.subr.mxu0 0.0
    %269 = vmatpush1.msra.mxu0 %v239
    %270 = vmatprep.subr.mxu0 0.0
    %271 = vmatpush1.msra.mxu0 %v240
    %272 = vmatprep.subr.mxu0 0.0
    %273 = vmatpush1.msra.mxu0 %v241
    %274 = vmatprep.subr.mxu0 0.0
    %275 = vmatpush1.msra.mxu0 %v242
    %276 = vmatprep.subr.mxu0 0.0
    %277 = vmatpush1.msra.mxu0 %v243
    %278 = vmatprep.subr.mxu0 0.0
    %279 = vmatpush1.msra.mxu0 %v244
    %280 = vmatprep.subr.mxu0 0.0
    %281 = vmatpush1.msra.mxu0 %v245
    %282 = vmatprep.subr.mxu0 0.0
    %283 = vmatpush1.msra.mxu0 %v246
    %284 = vmatprep.subr.mxu0 0.0
    %285 = vmatpush1.msra.mxu0 %v247
    %286 = vmatprep.subr.mxu0 0.0
    %287 = vmatpush1.msra.mxu0 %v248
    %288 = vmatprep.subr.mxu0 0.0
    %289 = vmatpush1.msra.mxu0 0.0
    %290 = vmatprep.subr.mxu0 0.0
    %291 = vmatpush1.msra.mxu0 0.0
    %292 = vmatprep.subr.mxu0 0.0
    %293 = vmatpush1.msra.mxu0 0.0
    %294 = vmatprep.subr.mxu0 0.0
    %295 = vmatpush1.msra.mxu0 0.0
    %296 = vmatprep.subr.mxu0 0.0
    %297 = vmatpush1.msra.mxu0 0.0
    %298 = vmatprep.subr.mxu0 0.0
    %299 = vmatpush1.msra.mxu0 0.0
    %300 = vmatprep.subr.mxu0 0.0
    %301 = vmatpush1.msra.mxu0 0.0
    %302 = vmatprep.subr.mxu0 0.0
    %303 = vmatpush1.msra.mxu0 0.0
    %304 = vmatprep.subr.mxu0 0.0
    %305 = vmatpush1.msra.mxu0 0.0
    %306 = vmatprep.subr.mxu0 0.0
    %307 = vmatpush1.msra.mxu0 0.0
    %308 = vmatprep.subr.mxu0 0.0
    %309 = vmatpush1.msra.mxu0 0.0
    %310 = vmatprep.subr.mxu0 0.0
    %311 = vmatpush1.msra.mxu0 0.0
    %312 = vmatprep.subr.mxu0 0.0
    %313 = vmatpush1.msra.mxu0 0.0
    %314 = vmatprep.subr.mxu0 0.0
    %315 = vmatpush1.msra.mxu0 0.0
    %316 = vmatprep.subr.mxu0 0.0
    %317 = vmatpush1.msra.mxu0 0.0
    %318 = vmatprep.subr.mxu0 0.0
    %319 = vmatpush1.msra.mxu0 0.0
    %320 = vmatprep.mubr.f32.mxu0 0.0
    %321 = vmatmul.mubr.f32.gmra.mrb[0].mxu0 %v232
    %v322 = vpop.f32.mrb[0].mxu0
    %v323 = vadd.f32 %v254, %v322
    %v324 = vpop.f32.mrb[0].mxu0
    %325 = vdwg.mxu0
    %v326 = vmax.f32 %v323, 0.0
    %v327 = vld [vmem:[%s7] sm:$0x1]
    %v329 = vlaneseq
    %v330 = vshrl.u32 %v329, 7
    %v331 = vsub.s32 0, %v330
    %v332 = vrot.slane %v327, %v331
    %v334 = vmul.f32 %v326, %v332
    %vm335 = vcmask 1041408
    %v336 = vsel %vm335, %v334, 0.0
    %337 = vadd.xlane.f32.xlu0 %v336
    %v338 = vpop.xlane.xlu0 %337
    %v339 = vld [vmem:[#allocation2] sm:$0x1]
    %v341 = vlaneseq
    %v342 = vshrl.u32 %v341, 7
    %v343 = vsub.s32 0, %v342
    %v344 = vrot.slane %v339, %v343
    %v346 = vadd.f32 %v338, %v344
    %vm347 = vcmask 1024
    %348 = vst.msk [vmem:[%s9] sm:$0x3] %vm347, %v346
    // Predicated region
    $region46: #{qfunction_forward.1} parent=1 // pred_check
      _
    $region47: #{qfunction_forward.1} parent=1 // pred_check_branch
      %350 = sbr.rel (0) target = $region49
    $region48: #{qfunction_forward.1} parent=1 // pred_region
      _
    $region49: #{qfunction_forward.1} parent=1 // pred_fallthru
      _
    // Predicated region
    $region50: #{qfunction_forward.1} parent=1 // pred_check
      _
    $region51: #{qfunction_forward.1} parent=1 // pred_check_branch
      %352 = sbr.rel (0) target = $region53
    $region52: #{qfunction_forward.1} parent=1 // pred_region
      _
    $region53: #{qfunction_forward.1} parent=1 // pred_fallthru
      _
    %353 = vsyncpa [#allocation4], 1
    %354 = vsyncpa [#allocation6], 1

</llo_original>
